<compile_context>
chip_gen: v7x
topology: tpu7x:2x2x1
jax: 0.10.0
libtpu: 0.0.40
codegen_flags: <defaults>
</compile_context>

<pallas_src>
import jax
import jax.numpy as jnp
from jax.experimental import pallas as pl
from jax.experimental.pallas import tpu as pltpu


# Mirrors the activation choices in the PyTorch module (default: tanh).
_ACTIVATIONS = {
    "tanh": jnp.tanh,
    "sin": jnp.sin,
    "relu": lambda h: jnp.maximum(h, 0.0),
    "leaky_relu": lambda h: jnp.where(h >= 0, h, 0.01 * h),
}


def _make_mlp_kernel(n_layers: int, activation: str, use_bf16_matmul: bool):
    """Builds kernel(x_ref, w0, b0, w1, b1, ..., out_ref).

    x_ref:   (input_dim, batch_tile)  f32   -- batch on the lane axis
    w_i:     (out_i, in_i)            f32/bf16  -- native PyTorch Linear layout
    b_i:     (out_i, 1)               f32   -- broadcasts over lanes
    out_ref: (output_dim, batch_tile) f32
    """
    act = _ACTIVATIONS[activation]

    def kernel(x_ref, *refs):
        out_ref = refs[-1]
        wb_refs = refs[:-1]
        h = x_ref[...]  # (in_dim, bt), f32
        for i in range(n_layers):
            w = wb_refs[2 * i][...]       # (out_i, in_i)
            b = wb_refs[2 * i + 1][...]   # (out_i, 1)
            if use_bf16_matmul:
                # bf16 operands, f32 accumulation on the MXU; bias add and
                # activation stay in f32.
                acc = jnp.dot(w, h.astype(jnp.bfloat16),
                              preferred_element_type=jnp.float32)
            else:
                acc = jnp.dot(w, h, preferred_element_type=jnp.float32)
            h = acc + b
            if i < n_layers - 1:
                h = act(h)
        # TODO(synk): if bundle dumps show spill-driven vld/vst at very large
        #             hidden_dim x batch_tile, stage the inter-layer activation
        #             in a ping-pong VMEM scratch instead of the unrolled vreg
        #             chain.
        out_ref[...] = h.astype(out_ref.dtype)

    return kernel


def _ceil_to(x: int, m: int) -> int:
    return ((x + m - 1) // m) * m


def _choose_batch_tile(B: int) -> int:
    """Lane/MXU-aligned batch tile.

    Small batches (<= 256) use one full-array block.  Larger batches use the
    biggest 256-aligned tile <= 2048 lanes that yields an EVEN number of grid
    steps (feeds both v7x TensorCores; amortizes the ~600-cycle step cost).
    """
    if B <= 256:
        return B
    cap = 2048
    n = max(2, -(-B // cap))   # ceil(B / cap), at least 2 grid steps
    if n % 2:
        n += 1                 # even step count for megacore balance
    while True:
        tile = _ceil_to(-(-B // n), 256)
        if tile <= cap:
            return tile
        n += 2


def _build_call(in_dim, out_dim, wb_shapes, batch_tile, num_tiles, n_layers,
                activation, use_bf16_matmul, single_buffer_weights):
    kernel = _make_mlp_kernel(n_layers, activation, use_bf16_matmul)

    wb_kwargs = {}
    if single_buffer_weights:
        # Grid-invariant blocks: one buffer is enough, double-buffering them
        # only burns VMEM and DMA setup.
        wb_kwargs = dict(pipeline_mode=pl.Buffered(1))

    in_specs = [pl.BlockSpec((in_dim, batch_tile), lambda i: (0, i))]
    for w_shape, b_shape in wb_shapes:
        in_specs.append(pl.BlockSpec(w_shape, lambda i: (0, 0), **wb_kwargs))
        in_specs.append(pl.BlockSpec(b_shape, lambda i: (0, 0), **wb_kwargs))

    # Lane-dense output: (out_dim, batch_tile) — full 128-lane stores.
    out_spec = pl.BlockSpec((out_dim, batch_tile), lambda i: (0, i))

    return pl.pallas_call(
        kernel,
        out_shape=jax.ShapeDtypeStruct((out_dim, num_tiles * batch_tile),
                                       jnp.float32),
        grid_spec=pl.GridSpec(
            grid=(num_tiles,),
            in_specs=in_specs,
            out_specs=out_spec,
        ),
        compiler_params=pltpu.CompilerParams(
            dimension_semantics=("parallel",),
        ),
    )


def mlp_forward_t(x_t, weights, biases, *, activation="tanh", batch_tile=None,
                  use_bf16_matmul=None):
    """Feature-major forward pass.

    x_t:      (input_dim, B) float32 — batch on the last (lane) axis
    weights:  list of (out_i, in_i) float32 arrays (native nn.Linear layout)
    biases:   list of (out_i, 1)   float32 arrays
    Returns:  (output_dim, B) float32

    No transposes; pads the batch only when B % batch_tile != 0.
    """
    n_layers = len(weights)
    in_dim, B = x_t.shape
    out_dim = weights[-1].shape[0]

    if batch_tile is None:
        batch_tile = _choose_batch_tile(B)
    num_tiles = (B + batch_tile - 1) // batch_tile
    B_pad = num_tiles * batch_tile
    if B_pad != B:
        x_t = jnp.pad(x_t, ((0, 0), (0, B_pad - B)))

    if use_bf16_matmul is None:
        # Only worth it once layers are wide; neutral (or slightly lossy) at
        # tiny widths like the default hidden=32.
        use_bf16_matmul = max(max(w.shape) for w in weights) >= 512
    if use_bf16_matmul:
        weights = [w.astype(jnp.bfloat16) for w in weights]  # halves weight DMA

    wb_args, wb_shapes = [], []
    for w, b in zip(weights, biases):
        wb_args.extend([w, b])
        wb_shapes.append((w.shape, b.shape))

    try:
        call = _build_call(in_dim, out_dim, wb_shapes, batch_tile, num_tiles,
                           n_layers, activation, use_bf16_matmul,
                           single_buffer_weights=True)
        out_t = call(x_t, *wb_args)
    except Exception:
        # Some JAX builds reject pipeline_mode on BlockSpec for pallas_call;
        # fall back to default (double-buffered) weight blocks.
        call = _build_call(in_dim, out_dim, wb_shapes, batch_tile, num_tiles,
                           n_layers, activation, use_bf16_matmul,
                           single_buffer_weights=False)
        out_t = call(x_t, *wb_args)

    if B_pad != B:
        out_t = out_t[:, :B]
    return out_t


def mlp_forward(x, weights, biases, **kwargs):
    """PyTorch-convention forward: x is (B, input_dim); returns (B, output_dim)."""
    out_t = mlp_forward_t(x.T, weights, biases, **kwargs)
    return out_t.T


def init_nns_params(key, input_dim, hidden_dim, hidden_layer_num, output_dim):
    """Deterministic init mimicking nn.Linear's U(-1/sqrt(fan_in), 1/sqrt(fan_in)).

    Weights in native PyTorch (out, in) layout; biases as (out, 1).
    """
    dims = [input_dim] + [hidden_dim] * hidden_layer_num + [output_dim]
    weights, biases = [], []
    for i in range(len(dims) - 1):
        fan_in, fan_out = dims[i], dims[i + 1]
        key, kw, kb = jax.random.split(key, 3)
        bound = 1.0 / jnp.sqrt(jnp.float32(fan_in))
        w = jax.random.uniform(kw, (fan_out, fan_in), jnp.float32, -bound, bound)
        b = jax.random.uniform(kb, (fan_out, 1), jnp.float32, -bound, bound)
        weights.append(w)
        biases.append(b)
    return weights, biases


def mlp_reference(x, weights, biases, activation="tanh"):
    act = _ACTIVATIONS[activation]
    h = x
    for i, (w, b) in enumerate(zip(weights, biases)):
        h = h @ w.T + b[:, 0]
        if i < len(weights) - 1:
            h = act(h)
    return h


if __name__ == "__main__":
    # NNs(input_dim=4, hidden_layer_dim=32, hidden_layer_num=2,
    #     output_dim=2, activation='tanh')
    input_dim, hidden_dim, hidden_layer_num, output_dim = 4, 32, 2, 2

    key = jax.random.PRNGKey(0)
    key, kx = jax.random.split(key)
    weights, biases = init_nns_params(
        key, input_dim, hidden_dim, hidden_layer_num, output_dim
    )

    # 1) Lane-aligned batch: single full tile, no padding.
    x = jax.random.normal(kx, (256, input_dim), jnp.float32)
    out = jax.block_until_ready(mlp_forward(x, weights, biases))
    ref = mlp_reference(x, weights, biases)
    assert out.shape == (256, output_dim)
    assert jnp.allclose(out, ref, atol=1e-5, rtol=1e-5)

    # 2) Feature-major entry point (no wrapper transposes), multi-tile grid
    #    (B=1024 -> tile=512, 2 parallel grid steps).
    xb = jax.random.normal(jax.random.PRNGKey(1), (input_dim, 1024), jnp.float32)
    out_t = jax.block_until_ready(mlp_forward_t(xb, weights, biases))
    assert out_t.shape == (output_dim, 1024)
    assert jnp.allclose(out_t, mlp_reference(xb.T, weights, biases).T,
                        atol=1e-5, rtol=1e-5)

    # 3) Ragged small batch (single full-array block, no padding path).
    x_small = x[:50]
    out_small = jax.block_until_ready(mlp_forward(x_small, weights, biases))
    assert out_small.shape == (50, output_dim)
    assert jnp.allclose(out_small, mlp_reference(x_small, weights, biases),
                        atol=1e-5, rtol=1e-5)

    # 4) Ragged large batch (exercises the pad/slice path: 300 -> 2 x 256).
    xr = jax.random.normal(jax.random.PRNGKey(2), (input_dim, 300), jnp.float32)
    out_r = jax.block_until_ready(mlp_forward_t(xr, weights, biases))
    assert out_r.shape == (output_dim, 300)
    assert jnp.allclose(out_r, mlp_reference(xr.T, weights, biases).T,
                        atol=1e-5, rtol=1e-5)

    # 5) bf16-operand matmul path (normally auto-gated on wide hidden layers).
    out_bf16 = jax.block_until_ready(
        mlp_forward(x, weights, biases, use_bf16_matmul=True))
    assert jnp.allclose(out_bf16, ref, atol=5e-2, rtol=5e-2)

    print("KERNEL_OK")
</pallas_src>

<mosaic_0001>
module attributes {stable_mosaic.version = 11 : i64} {
  func.func @kernel(%arg0: i32, %arg1: memref<4x256xf32, #tpu.memory_space<vmem>>, %arg2: memref<32x4xf32, #tpu.memory_space<vmem>>, %arg3: memref<32x1xf32, #tpu.memory_space<vmem>>, %arg4: memref<32x32xf32, #tpu.memory_space<vmem>>, %arg5: memref<32x1xf32, #tpu.memory_space<vmem>>, %arg6: memref<2x32xf32, #tpu.memory_space<vmem>>, %arg7: memref<2x1xf32, #tpu.memory_space<vmem>>, %arg8: memref<2x256xf32, #tpu.memory_space<vmem>>) attributes {dimension_semantics = [#tpu.dimension_semantics<parallel>], iteration_bounds = array<i64: 1>, scalar_prefetch = 0 : i64, scratch_operands = 0 : i64, tpu.core_type = #tpu.core_type<tc>, window_params = [{transform_indices = @transform_0, window_bounds = array<i64: 4, 256>}, {pipeline_mode = #tpu.pipeline_mode<synchronous>, transform_indices = @transform_1, window_bounds = array<i64: 32, 4>}, {pipeline_mode = #tpu.pipeline_mode<synchronous>, transform_indices = @transform_2, window_bounds = array<i64: 32, 1>}, {pipeline_mode = #tpu.pipeline_mode<synchronous>, transform_indices = @transform_3, window_bounds = array<i64: 32, 32>}, {pipeline_mode = #tpu.pipeline_mode<synchronous>, transform_indices = @transform_4, window_bounds = array<i64: 32, 1>}, {pipeline_mode = #tpu.pipeline_mode<synchronous>, transform_indices = @transform_5, window_bounds = array<i64: 2, 32>}, {pipeline_mode = #tpu.pipeline_mode<synchronous>, transform_indices = @transform_6, window_bounds = array<i64: 2, 1>}, {transform_indices = @transform_7, window_bounds = array<i64: 2, 256>}]} {
    %c0 = arith.constant 0 : index
    %c0_0 = arith.constant 0 : index
    %0 = vector.load %arg1[%c0, %c0_0] : memref<4x256xf32, #tpu.memory_space<vmem>>, vector<4x256xf32>
    %c0_1 = arith.constant 0 : index
    %c0_2 = arith.constant 0 : index
    %1 = vector.load %arg2[%c0_1, %c0_2] : memref<32x4xf32, #tpu.memory_space<vmem>>, vector<32x4xf32>
    %c0_3 = arith.constant 0 : index
    %c0_4 = arith.constant 0 : index
    %2 = vector.load %arg3[%c0_3, %c0_4] : memref<32x1xf32, #tpu.memory_space<vmem>>, vector<32x1xf32>
    %cst = arith.constant dense<0.000000e+00> : vector<32x256xf32>
    %3 = tpu.matmul %1, %0, %cst {dimension_numbers = #tpu.dot_dimension_numbers<[1], [0], [0], [1], [0, 0, 1, 1], [], []>} : vector<32x4xf32>, vector<4x256xf32>, vector<32x256xf32> -> vector<32x256xf32>
    %4 = vector.broadcast %2 : vector<32x1xf32> to vector<32x256xf32>
    %5 = arith.addf %3, %4 : vector<32x256xf32>
    %6 = math.tanh %5 : vector<32x256xf32>
    %c0_5 = arith.constant 0 : index
    %c0_6 = arith.constant 0 : index
    %7 = vector.load %arg4[%c0_5, %c0_6] : memref<32x32xf32, #tpu.memory_space<vmem>>, vector<32x32xf32>
    %c0_7 = arith.constant 0 : index
    %c0_8 = arith.constant 0 : index
    %8 = vector.load %arg5[%c0_7, %c0_8] : memref<32x1xf32, #tpu.memory_space<vmem>>, vector<32x1xf32>
    %cst_9 = arith.constant dense<0.000000e+00> : vector<32x256xf32>
    %9 = tpu.matmul %7, %6, %cst_9 {dimension_numbers = #tpu.dot_dimension_numbers<[1], [0], [0], [1], [0, 0, 1, 1], [], []>} : vector<32x32xf32>, vector<32x256xf32>, vector<32x256xf32> -> vector<32x256xf32>
    %10 = vector.broadcast %8 : vector<32x1xf32> to vector<32x256xf32>
    %11 = arith.addf %9, %10 : vector<32x256xf32>
    %12 = math.tanh %11 : vector<32x256xf32>
    %c0_10 = arith.constant 0 : index
    %c0_11 = arith.constant 0 : index
    %13 = vector.load %arg6[%c0_10, %c0_11] : memref<2x32xf32, #tpu.memory_space<vmem>>, vector<2x32xf32>
    %c0_12 = arith.constant 0 : index
    %c0_13 = arith.constant 0 : index
    %14 = vector.load %arg7[%c0_12, %c0_13] : memref<2x1xf32, #tpu.memory_space<vmem>>, vector<2x1xf32>
    %cst_14 = arith.constant dense<0.000000e+00> : vector<2x256xf32>
    %15 = tpu.matmul %13, %12, %cst_14 {dimension_numbers = #tpu.dot_dimension_numbers<[1], [0], [0], [1], [0, 0, 1, 1], [], []>} : vector<2x32xf32>, vector<32x256xf32>, vector<2x256xf32> -> vector<2x256xf32>
    %16 = vector.broadcast %14 : vector<2x1xf32> to vector<2x256xf32>
    %17 = arith.addf %15, %16 : vector<2x256xf32>
    %c0_15 = arith.constant 0 : index
    %c0_16 = arith.constant 0 : index
    %18 = vector.load %arg8[%c0_15, %c0_16] : memref<2x256xf32, #tpu.memory_space<vmem>>, vector<2x256xf32>
    tpu.vector_store %arg8[%c0_15, %c0_16], %17 {strides = array<i32>} : memref<2x256xf32, #tpu.memory_space<vmem>>, vector<2x256xf32>,
    return
  }
  func.func @transform_0(%arg0: i32) -> (i32, i32) {
    %c0_i32 = arith.constant 0 : i32
    %c0_i32_0 = arith.constant 0 : i32
    return %c0_i32, %arg0 : i32, i32
  }
  func.func @transform_1(%arg0: i32) -> (i32, i32) {
    %c0_i32 = arith.constant 0 : i32
    %c0_i32_0 = arith.constant 0 : i32
    %c0_i32_1 = arith.constant 0 : i32
    return %c0_i32, %c0_i32_0 : i32, i32
  }
  func.func @transform_2(%arg0: i32) -> (i32, i32) {
    %c0_i32 = arith.constant 0 : i32
    %c0_i32_0 = arith.constant 0 : i32
    %c0_i32_1 = arith.constant 0 : i32
    return %c0_i32, %c0_i32_0 : i32, i32
  }
  func.func @transform_3(%arg0: i32) -> (i32, i32) {
    %c0_i32 = arith.constant 0 : i32
    %c0_i32_0 = arith.constant 0 : i32
    %c0_i32_1 = arith.constant 0 : i32
    return %c0_i32, %c0_i32_0 : i32, i32
  }
  func.func @transform_4(%arg0: i32) -> (i32, i32) {
    %c0_i32 = arith.constant 0 : i32
    %c0_i32_0 = arith.constant 0 : i32
    %c0_i32_1 = arith.constant 0 : i32
    return %c0_i32, %c0_i32_0 : i32, i32
  }
  func.func @transform_5(%arg0: i32) -> (i32, i32) {
    %c0_i32 = arith.constant 0 : i32
    %c0_i32_0 = arith.constant 0 : i32
    %c0_i32_1 = arith.constant 0 : i32
    return %c0_i32, %c0_i32_0 : i32, i32
  }
  func.func @transform_6(%arg0: i32) -> (i32, i32) {
    %c0_i32 = arith.constant 0 : i32
    %c0_i32_0 = arith.constant 0 : i32
    %c0_i32_1 = arith.constant 0 : i32
    return %c0_i32, %c0_i32_0 : i32, i32
  }
  func.func @transform_7(%arg0: i32) -> (i32, i32) {
    %c0_i32 = arith.constant 0 : i32
    %c0_i32_0 = arith.constant 0 : i32
    return %c0_i32, %arg0 : i32, i32
  }
}

module attributes {stable_mosaic.version = 11 : i64} {
  func.func @kernel(%arg0: i32, %arg1: memref<4x256xf32, #tpu.memory_space<vmem>>, %arg2: memref<32x4xf32, #tpu.memory_space<vmem>>, %arg3: memref<32x1xf32, #tpu.memory_space<vmem>>, %arg4: memref<32x32xf32, #tpu.memory_space<vmem>>, %arg5: memref<32x1xf32, #tpu.memory_space<vmem>>, %arg6: memref<2x32xf32, #tpu.memory_space<vmem>>, %arg7: memref<2x1xf32, #tpu.memory_space<vmem>>, %arg8: memref<2x256xf32, #tpu.memory_space<vmem>>) attributes {dimension_semantics = [#tpu.dimension_semantics<parallel>], iteration_bounds = array<i64: 1>, scalar_prefetch = 0 : i64, scratch_operands = 0 : i64, tpu.core_type = #tpu.core_type<tc>, window_params = [{transform_indices = @transform_0, window_bounds = array<i64: 4, 256>}, {pipeline_mode = #tpu.pipeline_mode<synchronous>, transform_indices = @transform_1, window_bounds = array<i64: 32, 4>}, {pipeline_mode = #tpu.pipeline_mode<synchronous>, transform_indices = @transform_2, window_bounds = array<i64: 32, 1>}, {pipeline_mode = #tpu.pipeline_mode<synchronous>, transform_indices = @transform_3, window_bounds = array<i64: 32, 32>}, {pipeline_mode = #tpu.pipeline_mode<synchronous>, transform_indices = @transform_4, window_bounds = array<i64: 32, 1>}, {pipeline_mode = #tpu.pipeline_mode<synchronous>, transform_indices = @transform_5, window_bounds = array<i64: 2, 32>}, {pipeline_mode = #tpu.pipeline_mode<synchronous>, transform_indices = @transform_6, window_bounds = array<i64: 2, 1>}, {transform_indices = @transform_7, window_bounds = array<i64: 2, 256>}]} {
    %c0 = arith.constant 0 : index
    %c0_0 = arith.constant 0 : index
    %0 = vector.load %arg1[%c0, %c0_0] : memref<4x256xf32, #tpu.memory_space<vmem>>, vector<4x256xf32>
    %c0_1 = arith.constant 0 : index
    %c0_2 = arith.constant 0 : index
    %1 = vector.load %arg2[%c0_1, %c0_2] : memref<32x4xf32, #tpu.memory_space<vmem>>, vector<32x4xf32>
    %c0_3 = arith.constant 0 : index
    %c0_4 = arith.constant 0 : index
    %2 = vector.load %arg3[%c0_3, %c0_4] : memref<32x1xf32, #tpu.memory_space<vmem>>, vector<32x1xf32>
    %cst = arith.constant dense<0.000000e+00> : vector<32x256xf32>
    %3 = tpu.matmul %1, %0, %cst {dimension_numbers = #tpu.dot_dimension_numbers<[1], [0], [0], [1], [0, 0, 1, 1], [], []>} : vector<32x4xf32>, vector<4x256xf32>, vector<32x256xf32> -> vector<32x256xf32>
    %4 = vector.broadcast %2 : vector<32x1xf32> to vector<32x256xf32>
    %5 = arith.addf %3, %4 : vector<32x256xf32>
    %6 = math.tanh %5 : vector<32x256xf32>
    %c0_5 = arith.constant 0 : index
    %c0_6 = arith.constant 0 : index
    %7 = vector.load %arg4[%c0_5, %c0_6] : memref<32x32xf32, #tpu.memory_space<vmem>>, vector<32x32xf32>
    %c0_7 = arith.constant 0 : index
    %c0_8 = arith.constant 0 : index
    %8 = vector.load %arg5[%c0_7, %c0_8] : memref<32x1xf32, #tpu.memory_space<vmem>>, vector<32x1xf32>
    %cst_9 = arith.constant dense<0.000000e+00> : vector<32x256xf32>
    %9 = tpu.matmul %7, %6, %cst_9 {dimension_numbers = #tpu.dot_dimension_numbers<[1], [0], [0], [1], [0, 0, 1, 1], [], []>} : vector<32x32xf32>, vector<32x256xf32>, vector<32x256xf32> -> vector<32x256xf32>
    %10 = vector.broadcast %8 : vector<32x1xf32> to vector<32x256xf32>
    %11 = arith.addf %9, %10 : vector<32x256xf32>
    %12 = math.tanh %11 : vector<32x256xf32>
    %c0_10 = arith.constant 0 : index
    %c0_11 = arith.constant 0 : index
    %13 = vector.load %arg6[%c0_10, %c0_11] : memref<2x32xf32, #tpu.memory_space<vmem>>, vector<2x32xf32>
    %c0_12 = arith.constant 0 : index
    %c0_13 = arith.constant 0 : index
    %14 = vector.load %arg7[%c0_12, %c0_13] : memref<2x1xf32, #tpu.memory_space<vmem>>, vector<2x1xf32>
    %cst_14 = arith.constant dense<0.000000e+00> : vector<2x256xf32>
    %15 = tpu.matmul %13, %12, %cst_14 {dimension_numbers = #tpu.dot_dimension_numbers<[1], [0], [0], [1], [0, 0, 1, 1], [], []>} : vector<2x32xf32>, vector<32x256xf32>, vector<2x256xf32> -> vector<2x256xf32>
    %16 = vector.broadcast %14 : vector<2x1xf32> to vector<2x256xf32>
    %17 = arith.addf %15, %16 : vector<2x256xf32>
    %c0_15 = arith.constant 0 : index
    %c0_16 = arith.constant 0 : index
    %18 = vector.load %arg8[%c0_15, %c0_16] : memref<2x256xf32, #tpu.memory_space<vmem>>, vector<2x256xf32>
    tpu.vector_store %arg8[%c0_15, %c0_16], %17 {strides = array<i32>} : memref<2x256xf32, #tpu.memory_space<vmem>>, vector<2x256xf32>,
    return
  }
  func.func @transform_0(%arg0: i32) -> (i32, i32) {
    %c0_i32 = arith.constant 0 : i32
    %c0_i32_0 = arith.constant 0 : i32
    return %c0_i32, %arg0 : i32, i32
  }
  func.func @transform_1(%arg0: i32) -> (i32, i32) {
    %c0_i32 = arith.constant 0 : i32
    %c0_i32_0 = arith.constant 0 : i32
    %c0_i32_1 = arith.constant 0 : i32
    return %c0_i32, %c0_i32_0 : i32, i32
  }
  func.func @transform_2(%arg0: i32) -> (i32, i32) {
    %c0_i32 = arith.constant 0 : i32
    %c0_i32_0 = arith.constant 0 : i32
    %c0_i32_1 = arith.constant 0 : i32
    return %c0_i32, %c0_i32_0 : i32, i32
  }
  func.func @transform_3(%arg0: i32) -> (i32, i32) {
    %c0_i32 = arith.constant 0 : i32
    %c0_i32_0 = arith.constant 0 : i32
    %c0_i32_1 = arith.constant 0 : i32
    return %c0_i32, %c0_i32_0 : i32, i32
  }
  func.func @transform_4(%arg0: i32) -> (i32, i32) {
    %c0_i32 = arith.constant 0 : i32
    %c0_i32_0 = arith.constant 0 : i32
    %c0_i32_1 = arith.constant 0 : i32
    return %c0_i32, %c0_i32_0 : i32, i32
  }
  func.func @transform_5(%arg0: i32) -> (i32, i32) {
    %c0_i32 = arith.constant 0 : i32
    %c0_i32_0 = arith.constant 0 : i32
    %c0_i32_1 = arith.constant 0 : i32
    return %c0_i32, %c0_i32_0 : i32, i32
  }
  func.func @transform_6(%arg0: i32) -> (i32, i32) {
    %c0_i32 = arith.constant 0 : i32
    %c0_i32_0 = arith.constant 0 : i32
    %c0_i32_1 = arith.constant 0 : i32
    return %c0_i32, %c0_i32_0 : i32, i32
  }
  func.func @transform_7(%arg0: i32) -> (i32, i32) {
    %c0_i32 = arith.constant 0 : i32
    %c0_i32_0 = arith.constant 0 : i32
    return %c0_i32, %arg0 : i32, i32
  }
}

</mosaic_0001>

<llo_original>
// kernel: tpu_custom_call.1
$region0: #{tpu_custom_call.1}
  #allocation0 [shape = 'u32[]', space=smem, size = 0x4, offset = 0x4, fixed_abs, tag = 'smem constant byte address 0x4 - core index']
  #allocation1 [shape = 'u32[144,128]{1,0:T(1,128)}', space=vmem, size = 0x12000, scoped, tag = 'internal scratch']
  %s0 = inlined_call_operand.vmem [shape: f32[4,256], index: 0, kind: input, shape index: {}]
  %s1 = inlined_call_operand.vmem [shape: f32[32,4], index: 1, kind: input, shape index: {}]
  %s2 = inlined_call_operand.vmem [shape: f32[32,1], index: 2, kind: input, shape index: {}]
  %s3 = inlined_call_operand.vmem [shape: f32[32,32], index: 3, kind: input, shape index: {}]
  %s4 = inlined_call_operand.vmem [shape: f32[32,1], index: 4, kind: input, shape index: {}]
  %s5 = inlined_call_operand.vmem [shape: f32[2,32], index: 5, kind: input, shape index: {}]
  %s6 = inlined_call_operand.vmem [shape: f32[2,1], index: 6, kind: input, shape index: {}]
  %s7 = inlined_call_operand.hbm [shape: f32[2,256], index: 7, kind: output, shape index: {}]
  %s8 = sld [smem:[#allocation0]]
  $region38: #{tpu_custom_call.1} parent=0
    _
  %s10 = ssub.s32 1, %s8
  %s11 = scalar_select 0, %s10, %s8
  $region1: #{tpu_custom_call.1} parent=0
    #allocation2 [shape = 'u8[2048]{0}', space=vmem, size = 0x800, scoped, tag = 'output window, operand 0, single buffered']
    #allocation3 [shape = 's32[1]{0}', space=sflag, size = 0x4, scoped, tag = 'scoped memory for tpu_custom_call.1']
    %12 = vsyncpa [#allocation3], 0
    // Predicated region
    $region2: #{tpu_custom_call.1} parent=1 // pred_check
      _
    $region3: #{tpu_custom_call.1} parent=1 // pred_check_branch
      %14 = sbr.rel (0) target = $region5
    $region4: #{tpu_custom_call.1} parent=1 // pred_region
      _
    $region5: #{tpu_custom_call.1} parent=1 // pred_fallthru
      _
    // Predicated region
    $region6: #{tpu_custom_call.1} parent=1 // pred_check
      _
    $region7: #{tpu_custom_call.1} parent=1 // pred_check_branch
      %16 = sbr.rel (0) target = $region9
    $region8: #{tpu_custom_call.1} parent=1 // pred_region
      _
    $region9: #{tpu_custom_call.1} parent=1 // pred_fallthru
      _
    // Predicated region
    $region10: #{tpu_custom_call.1} parent=1 // pred_check
      _
    $region11: #{tpu_custom_call.1} parent=1 // pred_check_branch
      %18 = sbr.rel (0) target = $region13
    $region12: #{tpu_custom_call.1} parent=1 // pred_region
      _
    $region13: #{tpu_custom_call.1} parent=1 // pred_fallthru
      _
    // Predicated region
    $region14: #{tpu_custom_call.1} parent=1 // pred_check
      _
    $region15: #{tpu_custom_call.1} parent=1 // pred_check_branch
      %20 = sbr.rel (0) target = $region17
    $region16: #{tpu_custom_call.1} parent=1 // pred_region
      _
    $region17: #{tpu_custom_call.1} parent=1 // pred_fallthru
      _
    // Predicated region
    $region18: #{tpu_custom_call.1} parent=1 // pred_check
      _
    $region19: #{tpu_custom_call.1} parent=1 // pred_check_branch
      %22 = sbr.rel (0) target = $region21
    $region20: #{tpu_custom_call.1} parent=1 // pred_region
      _
    $region21: #{tpu_custom_call.1} parent=1 // pred_fallthru
      _
    // Predicated region
    $region22: #{tpu_custom_call.1} parent=1 // pred_check
      _
    $region23: #{tpu_custom_call.1} parent=1 // pred_check_branch
      %24 = sbr.rel (0) target = $region25
    $region24: #{tpu_custom_call.1} parent=1 // pred_region
      _
    $region25: #{tpu_custom_call.1} parent=1 // pred_fallthru
      _
    // Predicated region
    $region26: #{tpu_custom_call.1} parent=1 // pred_check
      _
    $region27: #{tpu_custom_call.1} parent=1 // pred_check_branch
      %26 = sbr.rel (0) target = $region29
    $region28: #{tpu_custom_call.1} parent=1 // pred_region
      _
    $region29: #{tpu_custom_call.1} parent=1 // pred_fallthru
      _
    %v27 = vld [vmem:[%s0] sm:$0xff]
    %v28 = vld [vmem:[%s1] sm:$0xff]
    %v29 = vld [vmem:[%s1 + $0x8] sm:$0xff]
    %v30 = vld [vmem:[%s1 + $0x10] sm:$0xff]
    %v31 = vld [vmem:[%s1 + $0x18] sm:$0xff]
    %v32 = vld [vmem:[%s2] sm:$0xff]
    %v33 = vld [vmem:[%s2 + $0x8] sm:$0xff]
    %v34 = vld [vmem:[%s2 + $0x10] sm:$0xff]
    %v35 = vld [vmem:[%s2 + $0x18] sm:$0xff]
    %37 = vset.pattern.permute.xlu0 0
    %38 = vperm.xlu0 %37, %v32
    %v39 = vpop.permute.xlu0 %38
    %42 = vset.pattern.permute.xlu0 0
    %43 = vperm.xlu0 %42, %v33
    %v44 = vpop.permute.xlu0 %43
    %47 = vset.pattern.permute.xlu0 0
    %48 = vperm.xlu0 %47, %v34
    %v49 = vpop.permute.xlu0 %48
    %52 = vset.pattern.permute.xlu0 0
    %53 = vperm.xlu0 %52, %v35
    %v54 = vpop.permute.xlu0 %53
    %v57 = vcombine.high %v27, %v27
    %vm58 = vcmask 31744
    %v60 = vsel %vm58, %v28, 0
    %v63 = vsel %vm58, %v29, 0
    %v66 = vsel %vm58, %v30, 0
    %v69 = vsel %vm58, %v31, 0
    %vm71 = vcmask 1043456
    %v72 = vsel %vm71, %v27, 0
    %v74 = vsel %vm71, %v57, 0
    %76 = vmatprep.subr.mxu0 %v74
    %77 = vmatpush1.msra.mxu0 %v72
    %78 = vmatprep.subr.mxu0 0.0
    %79 = vmatpush1.msra.mxu0 0.0
    %80 = vmatprep.subr.mxu0 0.0
    %81 = vmatpush1.msra.mxu0 0.0
    %82 = vmatprep.subr.mxu0 0.0
    %83 = vmatpush1.msra.mxu0 0.0
    %84 = vmatprep.subr.mxu0 0.0
    %85 = vmatpush1.msra.mxu0 0.0
    %86 = vmatprep.subr.mxu0 0.0
    %87 = vmatpush1.msra.mxu0 0.0
    %88 = vmatprep.subr.mxu0 0.0
    %89 = vmatpush1.msra.mxu0 0.0
    %90 = vmatprep.subr.mxu0 0.0
    %91 = vmatpush1.msra.mxu0 0.0
    %92 = vmatprep.subr.mxu0 0.0
    %93 = vmatpush1.msra.mxu0 0.0
    %94 = vmatprep.subr.mxu0 0.0
    %95 = vmatpush1.msra.mxu0 0.0
    %96 = vmatprep.subr.mxu0 0.0
    %97 = vmatpush1.msra.mxu0 0.0
    %98 = vmatprep.subr.mxu0 0.0
    %99 = vmatpush1.msra.mxu0 0.0
    %100 = vmatprep.subr.mxu0 0.0
    %101 = vmatpush1.msra.mxu0 0.0
    %102 = vmatprep.subr.mxu0 0.0
    %103 = vmatpush1.msra.mxu0 0.0
    %104 = vmatprep.subr.mxu0 0.0
    %105 = vmatpush1.msra.mxu0 0.0
    %106 = vmatprep.subr.mxu0 0.0
    %107 = vmatpush1.msra.mxu0 0.0
    %108 = vmatprep.subr.mxu0 0.0
    %109 = vmatpush1.msra.mxu0 0.0
    %110 = vmatprep.subr.mxu0 0.0
    %111 = vmatpush1.msra.mxu0 0.0
    %112 = vmatprep.subr.mxu0 0.0
    %113 = vmatpush1.msra.mxu0 0.0
    %114 = vmatprep.subr.mxu0 0.0
    %115 = vmatpush1.msra.mxu0 0.0
    %116 = vmatprep.subr.mxu0 0.0
    %117 = vmatpush1.msra.mxu0 0.0
    %118 = vmatprep.subr.mxu0 0.0
    %119 = vmatpush1.msra.mxu0 0.0
    %120 = vmatprep.subr.mxu0 0.0
    %121 = vmatpush1.msra.mxu0 0.0
    %122 = vmatprep.subr.mxu0 0.0
    %123 = vmatpush1.msra.mxu0 0.0
    %124 = vmatprep.subr.mxu0 0.0
    %125 = vmatpush1.msra.mxu0 0.0
    %126 = vmatprep.subr.mxu0 0.0
    %127 = vmatpush1.msra.mxu0 0.0
    %128 = vmatprep.subr.mxu0 0.0
    %129 = vmatpush1.msra.mxu0 0.0
    %130 = vmatprep.subr.mxu0 0.0
    %131 = vmatpush1.msra.mxu0 0.0
    %132 = vmatprep.subr.mxu0 0.0
    %133 = vmatpush1.msra.mxu0 0.0
    %134 = vmatprep.subr.mxu0 0.0
    %135 = vmatpush1.msra.mxu0 0.0
    %136 = vmatprep.subr.mxu0 0.0
    %137 = vmatpush1.msra.mxu0 0.0
    %138 = vmatprep.subr.mxu0 0.0
    %139 = vmatpush1.msra.mxu0 0.0
    %140 = vmatprep.mubr.f32.mxu0 0.0
    %141 = vmatmul.mubr.f32.gmra.mrb[0].mxu0 %v60
    %v142 = vpop.f32.mrb[0].mxu0
    %v143 = vadd.f32 %v39, %v142
    %v144 = vpop.f32.mrb[0].mxu0
    %v145 = vadd.f32 %v39, %v144
    %146 = vmatprep.mubr.f32.mxu0 0.0
    %147 = vmatmul.mubr.f32.gmra.mrb[0].mxu0 %v63
    %v148 = vpop.f32.mrb[0].mxu0
    %v149 = vadd.f32 %v44, %v148
    %v150 = vpop.f32.mrb[0].mxu0
    %v151 = vadd.f32 %v44, %v150
    %152 = vmatprep.mubr.f32.mxu0 0.0
    %153 = vmatmul.mubr.f32.gmra.mrb[0].mxu0 %v66
    %v154 = vpop.f32.mrb[0].mxu0
    %v155 = vadd.f32 %v49, %v154
    %v156 = vpop.f32.mrb[0].mxu0
    %v157 = vadd.f32 %v49, %v156
    %158 = vmatprep.mubr.f32.mxu0 0.0
    %159 = vmatmul.mubr.f32.gmra.mrb[0].mxu0 %v69
    %v160 = vpop.f32.mrb[0].mxu0
    %v161 = vadd.f32 %v54, %v160
    %v162 = vpop.f32.mrb[0].mxu0
    %v163 = vadd.f32 %v54, %v162
    %164 = vdwg.mxu0
    %v165 = vtanh.pop %v143
    %v166 = vtanh.pop %v145
    %v167 = vtanh.pop %v149
    %v168 = vtanh.pop %v151
    %v169 = vtanh.pop %v155
    %v170 = vtanh.pop %v157
    %v171 = vtanh.pop %v161
    %v172 = vtanh.pop %v163
    %v173 = vld [vmem:[%s3] sm:$0xff]
    %v174 = vld [vmem:[%s3 + $0x8] sm:$0xff]
    %v175 = vld [vmem:[%s3 + $0x10] sm:$0xff]
    %v176 = vld [vmem:[%s3 + $0x18] sm:$0xff]
    %v177 = vld [vmem:[%s4] sm:$0xff]
    %v178 = vld [vmem:[%s4 + $0x8] sm:$0xff]
    %v179 = vld [vmem:[%s4 + $0x10] sm:$0xff]
    %v180 = vld [vmem:[%s4 + $0x18] sm:$0xff]
    %182 = vset.pattern.permute.xlu0 0
    %183 = vperm.xlu0 %182, %v177
    %v184 = vpop.permute.xlu0 %183
    %187 = vset.pattern.permute.xlu0 0
    %188 = vperm.xlu0 %187, %v178
    %v189 = vpop.permute.xlu0 %188
    %192 = vset.pattern.permute.xlu0 0
    %193 = vperm.xlu0 %192, %v179
    %v194 = vpop.permute.xlu0 %193
    %197 = vset.pattern.permute.xlu0 0
    %198 = vperm.xlu0 %197, %v180
    %v199 = vpop.permute.xlu0 %198
    %vm201 = vcmask 261120
    %v203 = vsel %vm201, %v173, 0
    %v206 = vsel %vm201, %v174, 0
    %v209 = vsel %vm201, %v175, 0
    %v212 = vsel %vm201, %v176, 0
    %214 = vmatprep.subr.mxu0 %v166
    %215 = vmatpush1.msra.mxu0 %v165
    %216 = vmatprep.subr.mxu0 %v168
    %217 = vmatpush1.msra.mxu0 %v167
    %218 = vmatprep.subr.mxu0 %v170
    %219 = vmatpush1.msra.mxu0 %v169
    %220 = vmatprep.subr.mxu0 %v172
    %221 = vmatpush1.msra.mxu0 %v171
    %222 = vmatprep.subr.mxu0 0.0
    %223 = vmatpush1.msra.mxu0 0.0
    %224 = vmatprep.subr.mxu0 0.0
    %225 = vmatpush1.msra.mxu0 0.0
    %226 = vmatprep.subr.mxu0 0.0
    %227 = vmatpush1.msra.mxu0 0.0
    %228 = vmatprep.subr.mxu0 0.0
    %229 = vmatpush1.msra.mxu0 0.0
    %230 = vmatprep.subr.mxu0 0.0
    %231 = vmatpush1.msra.mxu0 0.0
    %232 = vmatprep.subr.mxu0 0.0
    %233 = vmatpush1.msra.mxu0 0.0
    %234 = vmatprep.subr.mxu0 0.0
    %235 = vmatpush1.msra.mxu0 0.0
    %236 = vmatprep.subr.mxu0 0.0
    %237 = vmatpush1.msra.mxu0 0.0
    %238 = vmatprep.subr.mxu0 0.0
    %239 = vmatpush1.msra.mxu0 0.0
    %240 = vmatprep.subr.mxu0 0.0
    %241 = vmatpush1.msra.mxu0 0.0
    %242 = vmatprep.subr.mxu0 0.0
    %243 = vmatpush1.msra.mxu0 0.0
    %244 = vmatprep.subr.mxu0 0.0
    %245 = vmatpush1.msra.mxu0 0.0
    %246 = vmatprep.subr.mxu0 0.0
    %247 = vmatpush1.msra.mxu0 0.0
    %248 = vmatprep.subr.mxu0 0.0
    %249 = vmatpush1.msra.mxu0 0.0
    %250 = vmatprep.subr.mxu0 0.0
    %251 = vmatpush1.msra.mxu0 0.0
    %252 = vmatprep.subr.mxu0 0.0
    %253 = vmatpush1.msra.mxu0 0.0
    %254 = vmatprep.subr.mxu0 0.0
    %255 = vmatpush1.msra.mxu0 0.0
    %256 = vmatprep.subr.mxu0 0.0
    %257 = vmatpush1.msra.mxu0 0.0
    %258 = vmatprep.subr.mxu0 0.0
    %259 = vmatpush1.msra.mxu0 0.0
    %260 = vmatprep.subr.mxu0 0.0
    %261 = vmatpush1.msra.mxu0 0.0
    %262 = vmatprep.subr.mxu0 0.0
    %263 = vmatpush1.msra.mxu0 0.0
    %264 = vmatprep.subr.mxu0 0.0
    %265 = vmatpush1.msra.mxu0 0.0
    %266 = vmatprep.subr.mxu0 0.0
    %267 = vmatpush1.msra.mxu0 0.0
    %268 = vmatprep.subr.mxu0 0.0
    %269 = vmatpush1.msra.mxu0 0.0
    %270 = vmatprep.subr.mxu0 0.0
    %271 = vmatpush1.msra.mxu0 0.0
    %272 = vmatprep.subr.mxu0 0.0
    %273 = vmatpush1.msra.mxu0 0.0
    %274 = vmatprep.subr.mxu0 0.0
    %275 = vmatpush1.msra.mxu0 0.0
    %276 = vmatprep.subr.mxu0 0.0
    %277 = vmatpush1.msra.mxu0 0.0
    %278 = vmatprep.mubr.f32.mxu0 0.0
    %279 = vmatmul.mubr.f32.gmra.mrb[0].mxu0 %v203
    %v280 = vpop.f32.mrb[0].mxu0
    %v281 = vadd.f32 %v184, %v280
    %v282 = vpop.f32.mrb[0].mxu0
    %v283 = vadd.f32 %v184, %v282
    %284 = vmatprep.mubr.f32.mxu0 0.0
    %285 = vmatmul.mubr.f32.gmra.mrb[0].mxu0 %v206
    %v286 = vpop.f32.mrb[0].mxu0
    %v287 = vadd.f32 %v189, %v286
    %v288 = vpop.f32.mrb[0].mxu0
    %v289 = vadd.f32 %v189, %v288
    %290 = vmatprep.mubr.f32.mxu0 0.0
    %291 = vmatmul.mubr.f32.gmra.mrb[0].mxu0 %v209
    %v292 = vpop.f32.mrb[0].mxu0
    %v293 = vadd.f32 %v194, %v292
    %v294 = vpop.f32.mrb[0].mxu0
    %v295 = vadd.f32 %v194, %v294
    %296 = vmatprep.mubr.f32.mxu0 0.0
    %297 = vmatmul.mubr.f32.gmra.mrb[0].mxu0 %v212
    %v298 = vpop.f32.mrb[0].mxu0
    %v299 = vadd.f32 %v199, %v298
    %v300 = vpop.f32.mrb[0].mxu0
    %v301 = vadd.f32 %v199, %v300
    %302 = vdwg.mxu0
    %v303 = vtanh.pop %v281
    %v304 = vtanh.pop %v283
    %v305 = vtanh.pop %v287
    %v306 = vtanh.pop %v289
    %v307 = vtanh.pop %v293
    %v308 = vtanh.pop %v295
    %v309 = vtanh.pop %v299
    %v310 = vtanh.pop %v301
    %v311 = vld [vmem:[%s5] sm:$0x3]
    %v312 = vld [vmem:[%s6] sm:$0x3]
    %314 = vset.pattern.permute.xlu0 0
    %315 = vperm.xlu0 %314, %v312
    %v316 = vpop.permute.xlu0 %315
    %v319 = vsel %vm201, %v311, 0
    %321 = vmatprep.subr.mxu0 %v304
    %322 = vmatpush1.msra.mxu0 %v303
    %323 = vmatprep.subr.mxu0 %v306
    %324 = vmatpush1.msra.mxu0 %v305
    %325 = vmatprep.subr.mxu0 %v308
    %326 = vmatpush1.msra.mxu0 %v307
    %327 = vmatprep.subr.mxu0 %v310
    %328 = vmatpush1.msra.mxu0 %v309
    %329 = vmatprep.subr.mxu0 0.0
    %330 = vmatpush1.msra.mxu0 0.0
    %331 = vmatprep.subr.mxu0 0.0
    %332 = vmatpush1.msra.mxu0 0.0
    %333 = vmatprep.subr.mxu0 0.0
    %334 = vmatpush1.msra.mxu0 0.0
    %335 = vmatprep.subr.mxu0 0.0
    %336 = vmatpush1.msra.mxu0 0.0
    %337 = vmatprep.subr.mxu0 0.0
    %338 = vmatpush1.msra.mxu0 0.0
    %339 = vmatprep.subr.mxu0 0.0
    %340 = vmatpush1.msra.mxu0 0.0
    %341 = vmatprep.subr.mxu0 0.0
    %342 = vmatpush1.msra.mxu0 0.0
    %343 = vmatprep.subr.mxu0 0.0
    %344 = vmatpush1.msra.mxu0 0.0
    %345 = vmatprep.subr.mxu0 0.0
    %346 = vmatpush1.msra.mxu0 0.0
    %347 = vmatprep.subr.mxu0 0.0
    %348 = vmatpush1.msra.mxu0 0.0
    %349 = vmatprep.subr.mxu0 0.0
    %350 = vmatpush1.msra.mxu0 0.0
    %351 = vmatprep.subr.mxu0 0.0
    %352 = vmatpush1.msra.mxu0 0.0
    %353 = vmatprep.subr.mxu0 0.0
    %354 = vmatpush1.msra.mxu0 0.0
    %355 = vmatprep.subr.mxu0 0.0
    %356 = vmatpush1.msra.mxu0 0.0
    %357 = vmatprep.subr.mxu0 0.0
    %358 = vmatpush1.msra.mxu0 0.0
    %359 = vmatprep.subr.mxu0 0.0
    %360 = vmatpush1.msra.mxu0 0.0
    %361 = vmatprep.subr.mxu0 0.0
    %362 = vmatpush1.msra.mxu0 0.0
    %363 = vmatprep.subr.mxu0 0.0
    %364 = vmatpush1.msra.mxu0 0.0
    %365 = vmatprep.subr.mxu0 0.0
    %366 = vmatpush1.msra.mxu0 0.0
    %367 = vmatprep.subr.mxu0 0.0
    %368 = vmatpush1.msra.mxu0 0.0
    %369 = vmatprep.subr.mxu0 0.0
    %370 = vmatpush1.msra.mxu0 0.0
    %371 = vmatprep.subr.mxu0 0.0
    %372 = vmatpush1.msra.mxu0 0.0
    %373 = vmatprep.subr.mxu0 0.0
    %374 = vmatpush1.msra.mxu0 0.0
    %375 = vmatprep.subr.mxu0 0.0
    %376 = vmatpush1.msra.mxu0 0.0
    %377 = vmatprep.subr.mxu0 0.0
    %378 = vmatpush1.msra.mxu0 0.0
    %379 = vmatprep.subr.mxu0 0.0
    %380 = vmatpush1.msra.mxu0 0.0
    %381 = vmatprep.subr.mxu0 0.0
    %382 = vmatpush1.msra.mxu0 0.0
    %383 = vmatprep.subr.mxu0 0.0
    %384 = vmatpush1.msra.mxu0 0.0
    %385 = vmatprep.mubr.f32.mxu0 0.0
    %386 = vmatmul.mubr.f32.gmra.mrb[0].mxu0 %v319
    %v387 = vpop.f32.mrb[0].mxu0
    %v388 = vadd.f32 %v316, %v387
    %v389 = vpop.f32.mrb[0].mxu0
    %v390 = vadd.f32 %v316, %v389
    %391 = vdwg.mxu0
    %v394 = vcombine.low %v388, %v390
    %v396 = vunpack.c.l.s4 1983009808
    %v397 = vunpack.c.0.s8 %v396
    %v398 = vlaneseq
    %v399 = vshrl.u32 %v398, 7
    %v400 = vsub.s32 %v397, %v399
    %v401 = vrot.slane %v394, %v400
    %403 = vst [vmem:[#allocation2] sm:$0xf] %v401
    // Predicated region
    $region30: #{tpu_custom_call.1} parent=1 // pred_check
      _
    $region31: #{tpu_custom_call.1} parent=1 // pred_check_branch
      %405 = sbr.rel (0) target = $region33
    $region32: #{tpu_custom_call.1} parent=1 // pred_region
      %s407 = ssub.s32 64, 64
      %408 = vsyncadd [#allocation3], %s407
      %s410 = sshll.u32 [#allocation2], 4
      %s411 = int_to_ptr.vmem [resolvable:$true] %s410
      %413 = dma.vmem_to_hbm [thread:$0]  %s411, 64, %s7, [#allocation3]
    $region33: #{tpu_custom_call.1} parent=1 // pred_fallthru
      _
    // Predicated region
    $region34: #{tpu_custom_call.1} parent=1 // pred_check
      _
    $region35: #{tpu_custom_call.1} parent=1 // pred_check_branch
      %415 = sbr.rel (0) target = $region37
    $region36: #{tpu_custom_call.1} parent=1 // pred_region
      %416 = dma.done [#allocation3], 64
    $region37: #{tpu_custom_call.1} parent=1 // pred_fallthru
      _
    %417 = vsyncpa [#allocation3], 1

// kernel: tpu_custom_call.1
$region0: #{tpu_custom_call.1}
  #allocation0 [shape = 'u32[]', space=smem, size = 0x4, offset = 0x4, fixed_abs, tag = 'smem constant byte address 0x4 - core index']
  #allocation1 [shape = 'u32[144,128]{1,0:T(1,128)}', space=vmem, size = 0x12000, scoped, tag = 'internal scratch']
  %s0 = inlined_call_operand.vmem [shape: f32[4,256], index: 0, kind: input, shape index: {}]
  %s1 = inlined_call_operand.vmem [shape: f32[32,4], index: 1, kind: input, shape index: {}]
  %s2 = inlined_call_operand.vmem [shape: f32[32,1], index: 2, kind: input, shape index: {}]
  %s3 = inlined_call_operand.vmem [shape: f32[32,32], index: 3, kind: input, shape index: {}]
  %s4 = inlined_call_operand.vmem [shape: f32[32,1], index: 4, kind: input, shape index: {}]
  %s5 = inlined_call_operand.vmem [shape: f32[2,32], index: 5, kind: input, shape index: {}]
  %s6 = inlined_call_operand.vmem [shape: f32[2,1], index: 6, kind: input, shape index: {}]
  %s7 = inlined_call_operand.hbm [shape: f32[2,256], index: 7, kind: output, shape index: {}]
  %s8 = sld [smem:[#allocation0]]
  $region38: #{tpu_custom_call.1} parent=0
    _
  %s10 = ssub.s32 1, %s8
  %s11 = scalar_select 0, %s10, %s8
  $region1: #{tpu_custom_call.1} parent=0
    #allocation2 [shape = 'u8[2048]{0}', space=vmem, size = 0x800, scoped, tag = 'output window, operand 0, single buffered']
    #allocation3 [shape = 's32[1]{0}', space=sflag, size = 0x4, scoped, tag = 'scoped memory for tpu_custom_call.1']
    %12 = vsyncpa [#allocation3], 0
    // Predicated region
    $region2: #{tpu_custom_call.1} parent=1 // pred_check
      _
    $region3: #{tpu_custom_call.1} parent=1 // pred_check_branch
      %14 = sbr.rel (0) target = $region5
    $region4: #{tpu_custom_call.1} parent=1 // pred_region
      _
    $region5: #{tpu_custom_call.1} parent=1 // pred_fallthru
      _
    // Predicated region
    $region6: #{tpu_custom_call.1} parent=1 // pred_check
      _
    $region7: #{tpu_custom_call.1} parent=1 // pred_check_branch
      %16 = sbr.rel (0) target = $region9
    $region8: #{tpu_custom_call.1} parent=1 // pred_region
      _
    $region9: #{tpu_custom_call.1} parent=1 // pred_fallthru
      _
    // Predicated region
    $region10: #{tpu_custom_call.1} parent=1 // pred_check
      _
    $region11: #{tpu_custom_call.1} parent=1 // pred_check_branch
      %18 = sbr.rel (0) target = $region13
    $region12: #{tpu_custom_call.1} parent=1 // pred_region
      _
    $region13: #{tpu_custom_call.1} parent=1 // pred_fallthru
      _
    // Predicated region
    $region14: #{tpu_custom_call.1} parent=1 // pred_check
      _
    $region15: #{tpu_custom_call.1} parent=1 // pred_check_branch
      %20 = sbr.rel (0) target = $region17
    $region16: #{tpu_custom_call.1} parent=1 // pred_region
      _
    $region17: #{tpu_custom_call.1} parent=1 // pred_fallthru
      _
    // Predicated region
    $region18: #{tpu_custom_call.1} parent=1 // pred_check
      _
    $region19: #{tpu_custom_call.1} parent=1 // pred_check_branch
      %22 = sbr.rel (0) target = $region21
    $region20: #{tpu_custom_call.1} parent=1 // pred_region
      _
    $region21: #{tpu_custom_call.1} parent=1 // pred_fallthru
      _
    // Predicated region
    $region22: #{tpu_custom_call.1} parent=1 // pred_check
      _
    $region23: #{tpu_custom_call.1} parent=1 // pred_check_branch
      %24 = sbr.rel (0) target = $region25
    $region24: #{tpu_custom_call.1} parent=1 // pred_region
      _
    $region25: #{tpu_custom_call.1} parent=1 // pred_fallthru
      _
    // Predicated region
    $region26: #{tpu_custom_call.1} parent=1 // pred_check
      _
    $region27: #{tpu_custom_call.1} parent=1 // pred_check_branch
      %26 = sbr.rel (0) target = $region29
    $region28: #{tpu_custom_call.1} parent=1 // pred_region
      _
    $region29: #{tpu_custom_call.1} parent=1 // pred_fallthru
      _
    %v27 = vld [vmem:[%s0] sm:$0xff]
    %v28 = vld [vmem:[%s1] sm:$0xff]
    %v29 = vld [vmem:[%s1 + $0x8] sm:$0xff]
    %v30 = vld [vmem:[%s1 + $0x10] sm:$0xff]
    %v31 = vld [vmem:[%s1 + $0x18] sm:$0xff]
    %v32 = vld [vmem:[%s2] sm:$0xff]
    %v33 = vld [vmem:[%s2 + $0x8] sm:$0xff]
    %v34 = vld [vmem:[%s2 + $0x10] sm:$0xff]
    %v35 = vld [vmem:[%s2 + $0x18] sm:$0xff]
    %37 = vset.pattern.permute.xlu0 0
    %38 = vperm.xlu0 %37, %v32
    %v39 = vpop.permute.xlu0 %38
    %42 = vset.pattern.permute.xlu0 0
    %43 = vperm.xlu0 %42, %v33
    %v44 = vpop.permute.xlu0 %43
    %47 = vset.pattern.permute.xlu0 0
    %48 = vperm.xlu0 %47, %v34
    %v49 = vpop.permute.xlu0 %48
    %52 = vset.pattern.permute.xlu0 0
    %53 = vperm.xlu0 %52, %v35
    %v54 = vpop.permute.xlu0 %53
    %v57 = vcombine.high %v27, %v27
    %vm58 = vcmask 31744
    %v60 = vsel %vm58, %v28, 0
    %v63 = vsel %vm58, %v29, 0
    %v66 = vsel %vm58, %v30, 0
    %v69 = vsel %vm58, %v31, 0
    %vm71 = vcmask 1043456
    %v72 = vsel %vm71, %v27, 0
    %v74 = vsel %vm71, %v57, 0
    %76 = vmatprep.subr.mxu0 %v74
    %77 = vmatpush1.msra.mxu0 %v72
    %78 = vmatprep.subr.mxu0 0.0
    %79 = vmatpush1.msra.mxu0 0.0
    %80 = vmatprep.subr.mxu0 0.0
    %81 = vmatpush1.msra.mxu0 0.0
    %82 = vmatprep.subr.mxu0 0.0
    %83 = vmatpush1.msra.mxu0 0.0
    %84 = vmatprep.subr.mxu0 0.0
    %85 = vmatpush1.msra.mxu0 0.0
    %86 = vmatprep.subr.mxu0 0.0
    %87 = vmatpush1.msra.mxu0 0.0
    %88 = vmatprep.subr.mxu0 0.0
    %89 = vmatpush1.msra.mxu0 0.0
    %90 = vmatprep.subr.mxu0 0.0
    %91 = vmatpush1.msra.mxu0 0.0
    %92 = vmatprep.subr.mxu0 0.0
    %93 = vmatpush1.msra.mxu0 0.0
    %94 = vmatprep.subr.mxu0 0.0
    %95 = vmatpush1.msra.mxu0 0.0
    %96 = vmatprep.subr.mxu0 0.0
    %97 = vmatpush1.msra.mxu0 0.0
    %98 = vmatprep.subr.mxu0 0.0
    %99 = vmatpush1.msra.mxu0 0.0
    %100 = vmatprep.subr.mxu0 0.0
    %101 = vmatpush1.msra.mxu0 0.0
    %102 = vmatprep.subr.mxu0 0.0
    %103 = vmatpush1.msra.mxu0 0.0
    %104 = vmatprep.subr.mxu0 0.0
    %105 = vmatpush1.msra.mxu0 0.0
    %106 = vmatprep.subr.mxu0 0.0
    %107 = vmatpush1.msra.mxu0 0.0
    %108 = vmatprep.subr.mxu0 0.0
    %109 = vmatpush1.msra.mxu0 0.0
    %110 = vmatprep.subr.mxu0 0.0
    %111 = vmatpush1.msra.mxu0 0.0
    %112 = vmatprep.subr.mxu0 0.0
    %113 = vmatpush1.msra.mxu0 0.0
    %114 = vmatprep.subr.mxu0 0.0
    %115 = vmatpush1.msra.mxu0 0.0
    %116 = vmatprep.subr.mxu0 0.0
    %117 = vmatpush1.msra.mxu0 0.0
    %118 = vmatprep.subr.mxu0 0.0
    %119 = vmatpush1.msra.mxu0 0.0
    %120 = vmatprep.subr.mxu0 0.0
    %121 = vmatpush1.msra.mxu0 0.0
    %122 = vmatprep.subr.mxu0 0.0
    %123 = vmatpush1.msra.mxu0 0.0
    %124 = vmatprep.subr.mxu0 0.0
    %125 = vmatpush1.msra.mxu0 0.0
    %126 = vmatprep.subr.mxu0 0.0
    %127 = vmatpush1.msra.mxu0 0.0
    %128 = vmatprep.subr.mxu0 0.0
    %129 = vmatpush1.msra.mxu0 0.0
    %130 = vmatprep.subr.mxu0 0.0
    %131 = vmatpush1.msra.mxu0 0.0
    %132 = vmatprep.subr.mxu0 0.0
    %133 = vmatpush1.msra.mxu0 0.0
    %134 = vmatprep.subr.mxu0 0.0
    %135 = vmatpush1.msra.mxu0 0.0
    %136 = vmatprep.subr.mxu0 0.0
    %137 = vmatpush1.msra.mxu0 0.0
    %138 = vmatprep.subr.mxu0 0.0
    %139 = vmatpush1.msra.mxu0 0.0
    %140 = vmatprep.mubr.f32.mxu0 0.0
    %141 = vmatmul.mubr.f32.gmra.mrb[0].mxu0 %v60
    %v142 = vpop.f32.mrb[0].mxu0
    %v143 = vadd.f32 %v39, %v142
    %v144 = vpop.f32.mrb[0].mxu0
    %v145 = vadd.f32 %v39, %v144
    %146 = vmatprep.mubr.f32.mxu0 0.0
    %147 = vmatmul.mubr.f32.gmra.mrb[0].mxu0 %v63
    %v148 = vpop.f32.mrb[0].mxu0
    %v149 = vadd.f32 %v44, %v148
    %v150 = vpop.f32.mrb[0].mxu0
    %v151 = vadd.f32 %v44, %v150
    %152 = vmatprep.mubr.f32.mxu0 0.0
    %153 = vmatmul.mubr.f32.gmra.mrb[0].mxu0 %v66
    %v154 = vpop.f32.mrb[0].mxu0
    %v155 = vadd.f32 %v49, %v154
    %v156 = vpop.f32.mrb[0].mxu0
    %v157 = vadd.f32 %v49, %v156
    %158 = vmatprep.mubr.f32.mxu0 0.0
    %159 = vmatmul.mubr.f32.gmra.mrb[0].mxu0 %v69
    %v160 = vpop.f32.mrb[0].mxu0
    %v161 = vadd.f32 %v54, %v160
    %v162 = vpop.f32.mrb[0].mxu0
    %v163 = vadd.f32 %v54, %v162
    %164 = vdwg.mxu0
    %v165 = vtanh.pop %v143
    %v166 = vtanh.pop %v145
    %v167 = vtanh.pop %v149
    %v168 = vtanh.pop %v151
    %v169 = vtanh.pop %v155
    %v170 = vtanh.pop %v157
    %v171 = vtanh.pop %v161
    %v172 = vtanh.pop %v163
    %v173 = vld [vmem:[%s3] sm:$0xff]
    %v174 = vld [vmem:[%s3 + $0x8] sm:$0xff]
    %v175 = vld [vmem:[%s3 + $0x10] sm:$0xff]
    %v176 = vld [vmem:[%s3 + $0x18] sm:$0xff]
    %v177 = vld [vmem:[%s4] sm:$0xff]
    %v178 = vld [vmem:[%s4 + $0x8] sm:$0xff]
    %v179 = vld [vmem:[%s4 + $0x10] sm:$0xff]
    %v180 = vld [vmem:[%s4 + $0x18] sm:$0xff]
    %182 = vset.pattern.permute.xlu0 0
    %183 = vperm.xlu0 %182, %v177
    %v184 = vpop.permute.xlu0 %183
    %187 = vset.pattern.permute.xlu0 0
    %188 = vperm.xlu0 %187, %v178
    %v189 = vpop.permute.xlu0 %188
    %192 = vset.pattern.permute.xlu0 0
    %193 = vperm.xlu0 %192, %v179
    %v194 = vpop.permute.xlu0 %193
    %197 = vset.pattern.permute.xlu0 0
    %198 = vperm.xlu0 %197, %v180
    %v199 = vpop.permute.xlu0 %198
    %vm201 = vcmask 261120
    %v203 = vsel %vm201, %v173, 0
    %v206 = vsel %vm201, %v174, 0
    %v209 = vsel %vm201, %v175, 0
    %v212 = vsel %vm201, %v176, 0
    %214 = vmatprep.subr.mxu0 %v166
    %215 = vmatpush1.msra.mxu0 %v165
    %216 = vmatprep.subr.mxu0 %v168
    %217 = vmatpush1.msra.mxu0 %v167
    %218 = vmatprep.subr.mxu0 %v170
    %219 = vmatpush1.msra.mxu0 %v169
    %220 = vmatprep.subr.mxu0 %v172
    %221 = vmatpush1.msra.mxu0 %v171
    %222 = vmatprep.subr.mxu0 0.0
    %223 = vmatpush1.msra.mxu0 0.0
    %224 = vmatprep.subr.mxu0 0.0
    %225 = vmatpush1.msra.mxu0 0.0
    %226 = vmatprep.subr.mxu0 0.0
    %227 = vmatpush1.msra.mxu0 0.0
    %228 = vmatprep.subr.mxu0 0.0
    %229 = vmatpush1.msra.mxu0 0.0
    %230 = vmatprep.subr.mxu0 0.0
    %231 = vmatpush1.msra.mxu0 0.0
    %232 = vmatprep.subr.mxu0 0.0
    %233 = vmatpush1.msra.mxu0 0.0
    %234 = vmatprep.subr.mxu0 0.0
    %235 = vmatpush1.msra.mxu0 0.0
    %236 = vmatprep.subr.mxu0 0.0
    %237 = vmatpush1.msra.mxu0 0.0
    %238 = vmatprep.subr.mxu0 0.0
    %239 = vmatpush1.msra.mxu0 0.0
    %240 = vmatprep.subr.mxu0 0.0
    %241 = vmatpush1.msra.mxu0 0.0
    %242 = vmatprep.subr.mxu0 0.0
    %243 = vmatpush1.msra.mxu0 0.0
    %244 = vmatprep.subr.mxu0 0.0
    %245 = vmatpush1.msra.mxu0 0.0
    %246 = vmatprep.subr.mxu0 0.0
    %247 = vmatpush1.msra.mxu0 0.0
    %248 = vmatprep.subr.mxu0 0.0
    %249 = vmatpush1.msra.mxu0 0.0
    %250 = vmatprep.subr.mxu0 0.0
    %251 = vmatpush1.msra.mxu0 0.0
    %252 = vmatprep.subr.mxu0 0.0
    %253 = vmatpush1.msra.mxu0 0.0
    %254 = vmatprep.subr.mxu0 0.0
    %255 = vmatpush1.msra.mxu0 0.0
    %256 = vmatprep.subr.mxu0 0.0
    %257 = vmatpush1.msra.mxu0 0.0
    %258 = vmatprep.subr.mxu0 0.0
    %259 = vmatpush1.msra.mxu0 0.0
    %260 = vmatprep.subr.mxu0 0.0
    %261 = vmatpush1.msra.mxu0 0.0
    %262 = vmatprep.subr.mxu0 0.0
    %263 = vmatpush1.msra.mxu0 0.0
    %264 = vmatprep.subr.mxu0 0.0
    %265 = vmatpush1.msra.mxu0 0.0
    %266 = vmatprep.subr.mxu0 0.0
    %267 = vmatpush1.msra.mxu0 0.0
    %268 = vmatprep.subr.mxu0 0.0
    %269 = vmatpush1.msra.mxu0 0.0
    %270 = vmatprep.subr.mxu0 0.0
    %271 = vmatpush1.msra.mxu0 0.0
    %272 = vmatprep.subr.mxu0 0.0
    %273 = vmatpush1.msra.mxu0 0.0
    %274 = vmatprep.subr.mxu0 0.0
    %275 = vmatpush1.msra.mxu0 0.0
    %276 = vmatprep.subr.mxu0 0.0
    %277 = vmatpush1.msra.mxu0 0.0
    %278 = vmatprep.mubr.f32.mxu0 0.0
    %279 = vmatmul.mubr.f32.gmra.mrb[0].mxu0 %v203
    %v280 = vpop.f32.mrb[0].mxu0
    %v281 = vadd.f32 %v184, %v280
    %v282 = vpop.f32.mrb[0].mxu0
    %v283 = vadd.f32 %v184, %v282
    %284 = vmatprep.mubr.f32.mxu0 0.0
    %285 = vmatmul.mubr.f32.gmra.mrb[0].mxu0 %v206
    %v286 = vpop.f32.mrb[0].mxu0
    %v287 = vadd.f32 %v189, %v286
    %v288 = vpop.f32.mrb[0].mxu0
    %v289 = vadd.f32 %v189, %v288
    %290 = vmatprep.mubr.f32.mxu0 0.0
    %291 = vmatmul.mubr.f32.gmra.mrb[0].mxu0 %v209
    %v292 = vpop.f32.mrb[0].mxu0
    %v293 = vadd.f32 %v194, %v292
    %v294 = vpop.f32.mrb[0].mxu0
    %v295 = vadd.f32 %v194, %v294
    %296 = vmatprep.mubr.f32.mxu0 0.0
    %297 = vmatmul.mubr.f32.gmra.mrb[0].mxu0 %v212
    %v298 = vpop.f32.mrb[0].mxu0
    %v299 = vadd.f32 %v199, %v298
    %v300 = vpop.f32.mrb[0].mxu0
    %v301 = vadd.f32 %v199, %v300
    %302 = vdwg.mxu0
    %v303 = vtanh.pop %v281
    %v304 = vtanh.pop %v283
    %v305 = vtanh.pop %v287
    %v306 = vtanh.pop %v289
    %v307 = vtanh.pop %v293
    %v308 = vtanh.pop %v295
    %v309 = vtanh.pop %v299
    %v310 = vtanh.pop %v301
    %v311 = vld [vmem:[%s5] sm:$0x3]
    %v312 = vld [vmem:[%s6] sm:$0x3]
    %314 = vset.pattern.permute.xlu0 0
    %315 = vperm.xlu0 %314, %v312
    %v316 = vpop.permute.xlu0 %315
    %v319 = vsel %vm201, %v311, 0
    %321 = vmatprep.subr.mxu0 %v304
    %322 = vmatpush1.msra.mxu0 %v303
    %323 = vmatprep.subr.mxu0 %v306
    %324 = vmatpush1.msra.mxu0 %v305
    %325 = vmatprep.subr.mxu0 %v308
    %326 = vmatpush1.msra.mxu0 %v307
    %327 = vmatprep.subr.mxu0 %v310
    %328 = vmatpush1.msra.mxu0 %v309
    %329 = vmatprep.subr.mxu0 0.0
    %330 = vmatpush1.msra.mxu0 0.0
    %331 = vmatprep.subr.mxu0 0.0
    %332 = vmatpush1.msra.mxu0 0.0
    %333 = vmatprep.subr.mxu0 0.0
    %334 = vmatpush1.msra.mxu0 0.0
    %335 = vmatprep.subr.mxu0 0.0
    %336 = vmatpush1.msra.mxu0 0.0
    %337 = vmatprep.subr.mxu0 0.0
    %338 = vmatpush1.msra.mxu0 0.0
    %339 = vmatprep.subr.mxu0 0.0
    %340 = vmatpush1.msra.mxu0 0.0
    %341 = vmatprep.subr.mxu0 0.0
    %342 = vmatpush1.msra.mxu0 0.0
    %343 = vmatprep.subr.mxu0 0.0
    %344 = vmatpush1.msra.mxu0 0.0
    %345 = vmatprep.subr.mxu0 0.0
    %346 = vmatpush1.msra.mxu0 0.0
    %347 = vmatprep.subr.mxu0 0.0
    %348 = vmatpush1.msra.mxu0 0.0
    %349 = vmatprep.subr.mxu0 0.0
    %350 = vmatpush1.msra.mxu0 0.0
    %351 = vmatprep.subr.mxu0 0.0
    %352 = vmatpush1.msra.mxu0 0.0
    %353 = vmatprep.subr.mxu0 0.0
    %354 = vmatpush1.msra.mxu0 0.0
    %355 = vmatprep.subr.mxu0 0.0
    %356 = vmatpush1.msra.mxu0 0.0
    %357 = vmatprep.subr.mxu0 0.0
    %358 = vmatpush1.msra.mxu0 0.0
    %359 = vmatprep.subr.mxu0 0.0
    %360 = vmatpush1.msra.mxu0 0.0
    %361 = vmatprep.subr.mxu0 0.0
    %362 = vmatpush1.msra.mxu0 0.0
    %363 = vmatprep.subr.mxu0 0.0
    %364 = vmatpush1.msra.mxu0 0.0
    %365 = vmatprep.subr.mxu0 0.0
    %366 = vmatpush1.msra.mxu0 0.0
    %367 = vmatprep.subr.mxu0 0.0
    %368 = vmatpush1.msra.mxu0 0.0
    %369 = vmatprep.subr.mxu0 0.0
    %370 = vmatpush1.msra.mxu0 0.0
    %371 = vmatprep.subr.mxu0 0.0
    %372 = vmatpush1.msra.mxu0 0.0
    %373 = vmatprep.subr.mxu0 0.0
    %374 = vmatpush1.msra.mxu0 0.0
    %375 = vmatprep.subr.mxu0 0.0
    %376 = vmatpush1.msra.mxu0 0.0
    %377 = vmatprep.subr.mxu0 0.0
    %378 = vmatpush1.msra.mxu0 0.0
    %379 = vmatprep.subr.mxu0 0.0
    %380 = vmatpush1.msra.mxu0 0.0
    %381 = vmatprep.subr.mxu0 0.0
    %382 = vmatpush1.msra.mxu0 0.0
    %383 = vmatprep.subr.mxu0 0.0
    %384 = vmatpush1.msra.mxu0 0.0
    %385 = vmatprep.mubr.f32.mxu0 0.0
    %386 = vmatmul.mubr.f32.gmra.mrb[0].mxu0 %v319
    %v387 = vpop.f32.mrb[0].mxu0
    %v388 = vadd.f32 %v316, %v387
    %v389 = vpop.f32.mrb[0].mxu0
    %v390 = vadd.f32 %v316, %v389
    %391 = vdwg.mxu0
    %v394 = vcombine.low %v388, %v390
    %v396 = vunpack.c.l.s4 1983009808
    %v397 = vunpack.c.0.s8 %v396
    %v398 = vlaneseq
    %v399 = vshrl.u32 %v398, 7
    %v400 = vsub.s32 %v397, %v399
    %v401 = vrot.slane %v394, %v400
    %403 = vst [vmem:[#allocation2] sm:$0xf] %v401
    // Predicated region
    $region30: #{tpu_custom_call.1} parent=1 // pred_check
      _
    $region31: #{tpu_custom_call.1} parent=1 // pred_check_branch
      %405 = sbr.rel (0) target = $region33
    $region32: #{tpu_custom_call.1} parent=1 // pred_region
      %s407 = ssub.s32 64, 64
      %408 = vsyncadd [#allocation3], %s407
      %s410 = sshll.u32 [#allocation2], 4
      %s411 = int_to_ptr.vmem [resolvable:$true] %s410
      %413 = dma.vmem_to_hbm [thread:$0]  %s411, 64, %s7, [#allocation3]
    $region33: #{tpu_custom_call.1} parent=1 // pred_fallthru
      _
    // Predicated region
    $region34: #{tpu_custom_call.1} parent=1 // pred_check
      _
    $region35: #{tpu_custom_call.1} parent=1 // pred_check_branch
      %415 = sbr.rel (0) target = $region37
    $region36: #{tpu_custom_call.1} parent=1 // pred_region
      %416 = dma.done [#allocation3], 64
    $region37: #{tpu_custom_call.1} parent=1 // pred_fallthru
      _
    %417 = vsyncpa [#allocation3], 1

</llo_original>
